<compile_context>
chip_gen: v5e
topology: v5e:2x2
jax: 0.10.0
libtpu: 0.0.40
codegen_flags: <defaults>
</compile_context>

<pallas_src>
import functools

import jax
import jax.numpy as jnp
import numpy as np
from jax.experimental import pallas as pl
from jax.experimental.pallas import tpu as pltpu


def depthconv1d_kernel(
    x_ref, w1_ref, col_ref, dw_ref, wcat_ref, opk_ref,
    *rest,
    padding, dilation, L, L_out, eps, n_out, cin, compute_dtype,
):
    out_refs = rest[:n_out]
    pad_scratch = rest[n_out]

    H = dw_ref.shape[0]
    K = dw_ref.shape[1]

    # Packed per-channel columns: [b1, g1w, g1b, db, prelu1, prelu2]
    b1 = col_ref[:, 0:1]
    g1w = col_ref[:, 1:2]
    g1b = col_ref[:, 2:3]
    db = col_ref[:, 3:4]
    a1 = col_ref[:, 4:5]
    a2 = col_ref[:, 5:6]

    # ---- pointwise 1x1 conv: (H, Cin) @ (Cin, L) -> (H, L) on the MXU ----
    x = x_ref[0].astype(compute_dtype)
    y = jnp.dot(w1_ref[...].astype(compute_dtype), x,
                preferred_element_type=jnp.float32)
    y = y + b1

    # ---- PReLU 1 (single shared parameter broadcast per channel) ----
    y = jnp.where(y >= 0.0, y, a1 * y)

    # ---- GroupNorm(1, H) #1: single-pass stats, fused normalize+affine ----
    n1 = float(H * L)
    s1 = jnp.sum(y)
    ss1 = jnp.sum(y * y)
    mean1 = s1 / n1
    var1 = jnp.maximum(ss1 / n1 - mean1 * mean1, 0.0)
    rs1 = jax.lax.rsqrt(var1 + eps)
    scale1 = g1w * rs1                     # (H, 1)
    shift1 = g1b - mean1 * scale1          # (H, 1)

    # ---- write normalized activations into the padded conv scratch ----
    # Only the 2*padding boundary columns need zeros; interior is overwritten.
    if padding > 0:
        pad_scratch[:, :padding] = jnp.zeros((H, padding), jnp.float32)
        pad_scratch[:, padding + L:] = jnp.zeros((H, padding), jnp.float32)
    pad_scratch[:, padding:padding + L] = y * scale1 + shift1

    # ---- depthwise dilated conv1d (groups = H): unrolled MAC over K taps ----
    z = jnp.zeros((H, L_out), jnp.float32) + db
    for k in range(K):  # K is small & static -> fully unrolled, static slices
        z = z + dw_ref[:, k:k + 1] * pad_scratch[:, k * dilation:k * dilation + L_out]

    # ---- PReLU 2 ----
    z = jnp.where(z >= 0.0, z, a2 * z)

    # ---- GroupNorm(1, H) #2: single-pass stats; affine folded into wcat/bcat
    #      (host side); (x-mean)*rsqrt folded into the output matmul below ----
    n2 = float(H * L_out)
    s2 = jnp.sum(z)
    ss2 = jnp.sum(z * z)
    mean2 = s2 / n2
    var2 = jnp.maximum(ss2 / n2 - mean2 * mean2, 0.0)
    rs2 = jax.lax.rsqrt(var2 + eps)

    # ---- fused residual/skip 1x1 convs: one (R, H) @ (H, L_out) matmul ----
    acc = jnp.dot(wcat_ref[...].astype(compute_dtype), z.astype(compute_dtype),
                  preferred_element_type=jnp.float32)
    # outpack columns: [folded bias, row-sum of wcat]
    bias_eff = opk_ref[:, 0:1] - (mean2 * rs2) * opk_ref[:, 1:2]    # (R, 1)
    out = acc * rs2 + bias_eff                                      # (R, L_out)

    if n_out == 1:
        out_refs[0][0] = out.astype(out_refs[0].dtype)
    else:
        for i in range(n_out):
            out_refs[i][0] = out[i * cin:(i + 1) * cin, :].astype(out_refs[i].dtype)


def _prepare_packed_params(params, *, need_res, need_skip, compute_dtype):
    """Host-side parameter packing + GroupNorm-2 affine folding."""
    H, Cin = params["w1"].shape

    b1 = params["b1"].reshape(H, 1)
    g1w = params["g1w"].reshape(H, 1)
    g1b = params["g1b"].reshape(H, 1)
    db = params["db"].reshape(H, 1)
    p1 = jnp.broadcast_to(params["p1"].reshape(1, 1), (H, 1))
    p2 = jnp.broadcast_to(params["p2"].reshape(1, 1), (H, 1))
    colpack = jnp.concatenate([b1, g1w, g1b, db, p1, p2], axis=1)   # (H, 6)

    g2w = params["g2w"].reshape(H)       # (H,)
    g2b = params["g2b"].reshape(H, 1)    # (H, 1)

    w_list, b_list = [], []
    if need_res:
        wres = params["wres"]                      # (Cin, H)
        bres = params["bres"].reshape(Cin, 1)
        w_list.append(wres * g2w[None, :])         # fold g2w
        b_list.append(bres + wres @ g2b)           # fold g2b
    if need_skip:
        wskip = params["wskip"]
        bskip = params["bskip"].reshape(Cin, 1)
        w_list.append(wskip * g2w[None, :])
        b_list.append(bskip + wskip @ g2b)

    wcat = jnp.concatenate(w_list, axis=0)                          # (R, H)
    bcat = jnp.concatenate(b_list, axis=0)                          # (R, 1)
    rowsum = jnp.sum(wcat, axis=1, keepdims=True)                   # (R, 1)
    outpack = jnp.concatenate([bcat, rowsum], axis=1)               # (R, 2)

    w1 = params["w1"].astype(compute_dtype)
    wcat = wcat.astype(compute_dtype)
    return w1, colpack, params["dw"], wcat, outpack


def depth_conv1d_forward(x, params, *, kernel, padding, dilation,
                         skip=True, last=False,
                         compute_dtype=jnp.float32, vmem_limit_bytes=None):
    """Pallas implementation of DepthConv1d.forward.

    x: (B, Cin, L) float32.  Returns the same outputs as the PyTorch module:
      skip & last      -> skip
      skip & not last  -> (residual, skip)
      not skip         -> residual
    """
    B, Cin, L = x.shape
    H, K = params["dw"].shape
    assert K == kernel
    L_out = L + 2 * padding - dilation * (kernel - 1)
    eps = 1e-8

    need_skip = bool(skip)
    need_res = not (skip and last)
    n_out = int(need_res) + int(need_skip)

    w1, colpack, dw, wcat, outpack = _prepare_packed_params(
        params, need_res=need_res, need_skip=need_skip,
        compute_dtype=compute_dtype)
    in_arrays = [x, w1, colpack, dw, wcat, outpack]

    def full_spec(arr):
        nd = arr.ndim
        return pl.BlockSpec(arr.shape, lambda b, _nd=nd: (0,) * _nd)

    in_specs = [pl.BlockSpec((1, Cin, L), lambda b: (b, 0, 0))]
    in_specs += [full_spec(a) for a in in_arrays[1:]]

    out_specs = tuple(pl.BlockSpec((1, Cin, L_out), lambda b: (b, 0, 0))
                      for _ in range(n_out))
    out_shape = tuple(jax.ShapeDtypeStruct((B, Cin, L_out), x.dtype)
                      for _ in range(n_out))

    kernel_fn = functools.partial(
        depthconv1d_kernel,
        padding=padding, dilation=dilation, L=L, L_out=L_out, eps=eps,
        n_out=n_out, cin=Cin, compute_dtype=compute_dtype)

    outs = pl.pallas_call(
        kernel_fn,
        out_shape=out_shape,
        grid_spec=pltpu.PrefetchScalarGridSpec(
            num_scalar_prefetch=0,
            grid=(B,),
            in_specs=in_specs,
            out_specs=out_specs,
            scratch_shapes=[pltpu.VMEM((H, L + 2 * padding), jnp.float32)],
        ),
        compiler_params=pltpu.CompilerParams(
            dimension_semantics=("parallel",),   # batch is independent (v7x 2-TC)
            vmem_limit_bytes=vmem_limit_bytes),
    )(*in_arrays)

    if skip and last:
        return outs[0]                 # only skip was computed
    elif skip:
        return (outs[0], outs[1])      # (residual, skip)
    else:
        return outs[0]                 # only residual was computed


def init_params(key, input_channel, hidden_channel, kernel):
    """Deterministic parameter init matching the PyTorch module's shapes."""
    ks = jax.random.split(key, 8)
    Cin, H, K = input_channel, hidden_channel, kernel
    u = lambda k, shape, scale: jax.random.uniform(
        k, shape, jnp.float32, -scale, scale)
    return {
        # conv1d: Conv1d(Cin, H, 1)
        "w1": u(ks[0], (H, Cin), 1.0 / np.sqrt(Cin)),
        "b1": u(ks[1], (H, 1), 1.0 / np.sqrt(Cin)),
        # PReLU defaults (single parameter = 0.25)
        "p1": jnp.full((1, 1), 0.25, jnp.float32),
        "p2": jnp.full((1, 1), 0.25, jnp.float32),
        # GroupNorm(1, H): weight=1, bias=0 (kept general; folded host-side)
        "g1w": jnp.ones((H, 1), jnp.float32),
        "g1b": jnp.zeros((H, 1), jnp.float32),
        "g2w": jnp.ones((H, 1), jnp.float32),
        "g2b": jnp.zeros((H, 1), jnp.float32),
        # dconv1d: Conv1d(H, H, K, groups=H) -> weight (H, 1, K) squeezed to (H, K)
        "dw": u(ks[2], (H, K), 1.0 / np.sqrt(K)),
        "db": u(ks[3], (H, 1), 1.0 / np.sqrt(K)),
        # res_out / skip_out: Conv1d(H, Cin, 1)
        "wres": u(ks[4], (Cin, H), 1.0 / np.sqrt(H)),
        "bres": u(ks[5], (Cin, 1), 1.0 / np.sqrt(H)),
        "wskip": u(ks[6], (Cin, H), 1.0 / np.sqrt(H)),
        "bskip": u(ks[7], (Cin, 1), 1.0 / np.sqrt(H)),
    }


def ref_forward(x, p, *, kernel, padding, dilation):
    """Pure-JAX reference of the PyTorch forward (returns residual and skip)."""
    eps = 1e-8
    B, Cin, L = x.shape
    L_out = L + 2 * padding - dilation * (kernel - 1)

    y = jnp.einsum("hc,bcl->bhl", p["w1"], x) + p["b1"][None]
    y = jnp.where(y >= 0, y, p["p1"][0, 0] * y)
    m = y.mean(axis=(1, 2), keepdims=True)
    v = ((y - m) ** 2).mean(axis=(1, 2), keepdims=True)
    y = (y - m) / jnp.sqrt(v + eps) * p["g1w"][None] + p["g1b"][None]

    yp = jnp.pad(y, ((0, 0), (0, 0), (padding, padding)))
    z = jnp.broadcast_to(p["db"][None], (B, y.shape[1], L_out))
    for k in range(kernel):
        z = z + p["dw"][None, :, k:k + 1] * yp[:, :, k * dilation:k * dilation + L_out]
    z = jnp.where(z >= 0, z, p["p2"][0, 0] * z)
    m2 = z.mean(axis=(1, 2), keepdims=True)
    v2 = ((z - m2) ** 2).mean(axis=(1, 2), keepdims=True)
    z = (z - m2) / jnp.sqrt(v2 + eps) * p["g2w"][None] + p["g2b"][None]

    res = jnp.einsum("ch,bhl->bcl", p["wres"], z) + p["bres"][None]
    sk = jnp.einsum("ch,bhl->bcl", p["wskip"], z) + p["bskip"][None]
    return res, sk


if __name__ == "__main__":
    B, Cin, H, L = 2, 4, 32, 16
    kernel, dilation = 3, 1
    padding = (kernel - 1) * dilation // 2  # =1, keeps L_out == L

    key = jax.random.PRNGKey(0)
    kx, kp = jax.random.split(key)
    x = jax.random.normal(kx, (B, Cin, L), jnp.float32)
    params = init_params(kp, Cin, H, kernel)

    res_ref, skip_ref = ref_forward(
        x, params, kernel=kernel, padding=padding, dilation=dilation)

    # skip=True, last=False -> (residual, skip)
    residual, skip_out = depth_conv1d_forward(
        x, params, kernel=kernel, padding=padding, dilation=dilation,
        skip=True, last=False)
    jax.block_until_ready((residual, skip_out))
    np.testing.assert_allclose(np.asarray(residual), np.asarray(res_ref),
                               rtol=1e-4, atol=1e-4)
    np.testing.assert_allclose(np.asarray(skip_out), np.asarray(skip_ref),
                               rtol=1e-4, atol=1e-4)

    # skip=True, last=True -> skip only (residual matmul/store skipped entirely)
    skip_only = depth_conv1d_forward(
        x, params, kernel=kernel, padding=padding, dilation=dilation,
        skip=True, last=True)
    jax.block_until_ready(skip_only)
    np.testing.assert_allclose(np.asarray(skip_only), np.asarray(skip_ref),
                               rtol=1e-4, atol=1e-4)

    # skip=False -> residual only
    res_only = depth_conv1d_forward(
        x, params, kernel=kernel, padding=padding, dilation=dilation,
        skip=False, last=False)
    jax.block_until_ready(res_only)
    np.testing.assert_allclose(np.asarray(res_only), np.asarray(res_ref),
                               rtol=1e-4, atol=1e-4)

    print("KERNEL_OK")
</pallas_src>

<mosaic_0001>
module attributes {stable_mosaic.version = 11 : i64} {
  func.func @depthconv1d_kernel(%arg0: i32, %arg1: memref<1x4x16xf32, #tpu.memory_space<vmem>>, %arg2: memref<32x4xf32, #tpu.memory_space<vmem>>, %arg3: memref<32x6xf32, #tpu.memory_space<vmem>>, %arg4: memref<32x3xf32, #tpu.memory_space<vmem>>, %arg5: memref<8x32xf32, #tpu.memory_space<vmem>>, %arg6: memref<8x2xf32, #tpu.memory_space<vmem>>, %arg7: memref<1x4x16xf32, #tpu.memory_space<vmem>>, %arg8: memref<1x4x16xf32, #tpu.memory_space<vmem>>, %arg9: memref<32x18xf32, #tpu.memory_space<vmem>>) attributes {dimension_semantics = [#tpu.dimension_semantics<parallel>], iteration_bounds = array<i64: 2>, scalar_prefetch = 0 : i64, scratch_operands = 1 : i64, tpu.core_type = #tpu.core_type<tc>, window_params = [{transform_indices = @transform_0, window_bounds = array<i64: 1, 4, 16>}, {pipeline_mode = #tpu.pipeline_mode<synchronous>, transform_indices = @transform_1, window_bounds = array<i64: 32, 4>}, {pipeline_mode = #tpu.pipeline_mode<synchronous>, transform_indices = @transform_2, window_bounds = array<i64: 32, 6>}, {pipeline_mode = #tpu.pipeline_mode<synchronous>, transform_indices = @transform_3, window_bounds = array<i64: 32, 3>}, {pipeline_mode = #tpu.pipeline_mode<synchronous>, transform_indices = @transform_4, window_bounds = array<i64: 8, 32>}, {pipeline_mode = #tpu.pipeline_mode<synchronous>, transform_indices = @transform_5, window_bounds = array<i64: 8, 2>}, {transform_indices = @transform_6, window_bounds = array<i64: 1, 4, 16>}, {transform_indices = @transform_7, window_bounds = array<i64: 1, 4, 16>}]} {
    %c0 = arith.constant 0 : index
    %c0_0 = arith.constant 0 : index
    %0 = vector.load %arg3[%c0, %c0_0] : memref<32x6xf32, #tpu.memory_space<vmem>>, vector<32x1xf32>
    %c0_1 = arith.constant 0 : index
    %c1 = arith.constant 1 : index
    %1 = vector.load %arg3[%c0_1, %c1] : memref<32x6xf32, #tpu.memory_space<vmem>>, vector<32x1xf32>
    %c0_2 = arith.constant 0 : index
    %c2 = arith.constant 2 : index
    %2 = vector.load %arg3[%c0_2, %c2] : memref<32x6xf32, #tpu.memory_space<vmem>>, vector<32x1xf32>
    %c0_3 = arith.constant 0 : index
    %c3 = arith.constant 3 : index
    %3 = vector.load %arg3[%c0_3, %c3] : memref<32x6xf32, #tpu.memory_space<vmem>>, vector<32x1xf32>
    %c0_4 = arith.constant 0 : index
    %c4 = arith.constant 4 : index
    %4 = vector.load %arg3[%c0_4, %c4] : memref<32x6xf32, #tpu.memory_space<vmem>>, vector<32x1xf32>
    %c0_5 = arith.constant 0 : index
    %c5 = arith.constant 5 : index
    %5 = vector.load %arg3[%c0_5, %c5] : memref<32x6xf32, #tpu.memory_space<vmem>>, vector<32x1xf32>
    %c0_6 = arith.constant 0 : index
    %c0_7 = arith.constant 0 : index
    %c0_8 = arith.constant 0 : index
    %6 = vector.load %arg1[%c0_6, %c0_7, %c0_8] : memref<1x4x16xf32, #tpu.memory_space<vmem>>, vector<1x4x16xf32>
    %7 = vector.shape_cast %6 : vector<1x4x16xf32> to vector<4x16xf32>
    %c0_9 = arith.constant 0 : index
    %c0_10 = arith.constant 0 : index
    %8 = vector.load %arg2[%c0_9, %c0_10] : memref<32x4xf32, #tpu.memory_space<vmem>>, vector<32x4xf32>
    %cst = arith.constant dense<0.000000e+00> : vector<32x16xf32>
    %9 = tpu.matmul %8, %7, %cst {dimension_numbers = #tpu.dot_dimension_numbers<[1], [0], [0], [1], [0, 0, 1, 1], [], []>} : vector<32x4xf32>, vector<4x16xf32>, vector<32x16xf32> -> vector<32x16xf32>
    %10 = vector.broadcast %0 : vector<32x1xf32> to vector<32x16xf32>
    %11 = arith.addf %9, %10 : vector<32x16xf32>
    %cst_11 = arith.constant 0.000000e+00 : f32
    %12 = vector.broadcast %cst_11 : f32 to vector<32x16xf32>
    %13 = arith.cmpf oge, %11, %12 : vector<32x16xf32>
    %14 = vector.broadcast %4 : vector<32x1xf32> to vector<32x16xf32>
    %15 = arith.mulf %14, %11 : vector<32x16xf32>
    %16 = arith.select %13, %11, %15 : vector<32x16xi1>, vector<32x16xf32>
    %17 = vector.shape_cast %16 : vector<32x16xf32> to vector<1x32x16xf32>
    %cst_12 = arith.constant dense<0.000000e+00> : vector<1xf32>
    %18 = vector.multi_reduction <add>, %17, %cst_12 [1, 2] : vector<1x32x16xf32> to vector<1xf32>
    %19 = vector.shape_cast %18 : vector<1xf32> to vector<1x1x1xf32>
    %20 = vector.extract %19[0, 0, 0] : f32 from vector<1x1x1xf32>
    %21 = arith.mulf %16, %16 : vector<32x16xf32>
    %22 = vector.shape_cast %21 : vector<32x16xf32> to vector<1x32x16xf32>
    %cst_13 = arith.constant dense<0.000000e+00> : vector<1xf32>
    %23 = vector.multi_reduction <add>, %22, %cst_13 [1, 2] : vector<1x32x16xf32> to vector<1xf32>
    %24 = vector.shape_cast %23 : vector<1xf32> to vector<1x1x1xf32>
    %25 = vector.extract %24[0, 0, 0] : f32 from vector<1x1x1xf32>
    %cst_14 = arith.constant 5.120000e+02 : f32
    %26 = arith.divf %20, %cst_14 : f32
    %cst_15 = arith.constant 5.120000e+02 : f32
    %27 = arith.divf %25, %cst_15 : f32
    %28 = arith.mulf %26, %26 : f32
    %29 = arith.subf %27, %28 : f32
    %cst_16 = arith.constant 0.000000e+00 : f32
    %30 = arith.maximumf %29, %cst_16 : f32
    %cst_17 = arith.constant 9.99999993E-9 : f32
    %31 = arith.addf %30, %cst_17 : f32
    %32 = math.rsqrt %31 : f32
    %33 = vector.broadcast %32 : f32 to vector<32x1xf32>
    %34 = arith.mulf %1, %33 : vector<32x1xf32>
    %35 = vector.broadcast %26 : f32 to vector<32x1xf32>
    %36 = arith.mulf %35, %34 : vector<32x1xf32>
    %37 = arith.subf %2, %36 : vector<32x1xf32>
    %cst_18 = arith.constant 0.000000e+00 : f32
    %38 = vector.broadcast %cst_18 : f32 to vector<32x1xf32>
    %c0_19 = arith.constant 0 : index
    %c0_20 = arith.constant 0 : index
    %39 = vector.load %arg9[%c0_19, %c0_20] : memref<32x18xf32, #tpu.memory_space<vmem>>, vector<32x1xf32>
    tpu.vector_store %arg9[%c0_19, %c0_20], %38 {strides = array<i32>} : memref<32x18xf32, #tpu.memory_space<vmem>>, vector<32x1xf32>,
    %cst_21 = arith.constant 0.000000e+00 : f32
    %40 = vector.broadcast %cst_21 : f32 to vector<32x1xf32>
    %c0_22 = arith.constant 0 : index
    %c17 = arith.constant 17 : index
    %41 = vector.load %arg9[%c0_22, %c17] : memref<32x18xf32, #tpu.memory_space<vmem>>, vector<32x1xf32>
    tpu.vector_store %arg9[%c0_22, %c17], %40 {strides = array<i32>} : memref<32x18xf32, #tpu.memory_space<vmem>>, vector<32x1xf32>,
    %42 = vector.broadcast %34 : vector<32x1xf32> to vector<32x16xf32>
    %43 = arith.mulf %16, %42 : vector<32x16xf32>
    %44 = vector.broadcast %37 : vector<32x1xf32> to vector<32x16xf32>
    %45 = arith.addf %43, %44 : vector<32x16xf32>
    %c0_23 = arith.constant 0 : index
    %c1_24 = arith.constant 1 : index
    %46 = vector.load %arg9[%c0_23, %c1_24] : memref<32x18xf32, #tpu.memory_space<vmem>>, vector<32x16xf32>
    tpu.vector_store %arg9[%c0_23, %c1_24], %45 {strides = array<i32>} : memref<32x18xf32, #tpu.memory_space<vmem>>, vector<32x16xf32>,
    %cst_25 = arith.constant 0.000000e+00 : f32
    %47 = vector.broadcast %cst_25 : f32 to vector<32x16xf32>
    %48 = vector.broadcast %3 : vector<32x1xf32> to vector<32x16xf32>
    %49 = arith.addf %47, %48 : vector<32x16xf32>
    %c0_26 = arith.constant 0 : index
    %c0_27 = arith.constant 0 : index
    %50 = vector.load %arg4[%c0_26, %c0_27] : memref<32x3xf32, #tpu.memory_space<vmem>>, vector<32x1xf32>
    %c0_28 = arith.constant 0 : index
    %c0_29 = arith.constant 0 : index
    %51 = vector.load %arg9[%c0_28, %c0_29] : memref<32x18xf32, #tpu.memory_space<vmem>>, vector<32x16xf32>
    %52 = vector.broadcast %50 : vector<32x1xf32> to vector<32x16xf32>
    %53 = arith.mulf %52, %51 : vector<32x16xf32>
    %54 = arith.addf %49, %53 : vector<32x16xf32>
    %c0_30 = arith.constant 0 : index
    %c1_31 = arith.constant 1 : index
    %55 = vector.load %arg4[%c0_30, %c1_31] : memref<32x3xf32, #tpu.memory_space<vmem>>, vector<32x1xf32>
    %c0_32 = arith.constant 0 : index
    %c1_33 = arith.constant 1 : index
    %56 = vector.load %arg9[%c0_32, %c1_33] : memref<32x18xf32, #tpu.memory_space<vmem>>, vector<32x16xf32>
    %57 = vector.broadcast %55 : vector<32x1xf32> to vector<32x16xf32>
    %58 = arith.mulf %57, %56 : vector<32x16xf32>
    %59 = arith.addf %54, %58 : vector<32x16xf32>
    %c0_34 = arith.constant 0 : index
    %c2_35 = arith.constant 2 : index
    %60 = vector.load %arg4[%c0_34, %c2_35] : memref<32x3xf32, #tpu.memory_space<vmem>>, vector<32x1xf32>
    %c0_36 = arith.constant 0 : index
    %c2_37 = arith.constant 2 : index
    %61 = vector.load %arg9[%c0_36, %c2_37] : memref<32x18xf32, #tpu.memory_space<vmem>>, vector<32x16xf32>
    %62 = vector.broadcast %60 : vector<32x1xf32> to vector<32x16xf32>
    %63 = arith.mulf %62, %61 : vector<32x16xf32>
    %64 = arith.addf %59, %63 : vector<32x16xf32>
    %cst_38 = arith.constant 0.000000e+00 : f32
    %65 = vector.broadcast %cst_38 : f32 to vector<32x16xf32>
    %66 = arith.cmpf oge, %64, %65 : vector<32x16xf32>
    %67 = vector.broadcast %5 : vector<32x1xf32> to vector<32x16xf32>
    %68 = arith.mulf %67, %64 : vector<32x16xf32>
    %69 = arith.select %66, %64, %68 : vector<32x16xi1>, vector<32x16xf32>
    %70 = vector.shape_cast %69 : vector<32x16xf32> to vector<1x32x16xf32>
    %cst_39 = arith.constant dense<0.000000e+00> : vector<1xf32>
    %71 = vector.multi_reduction <add>, %70, %cst_39 [1, 2] : vector<1x32x16xf32> to vector<1xf32>
    %72 = vector.shape_cast %71 : vector<1xf32> to vector<1x1x1xf32>
    %73 = vector.extract %72[0, 0, 0] : f32 from vector<1x1x1xf32>
    %74 = arith.mulf %69, %69 : vector<32x16xf32>
    %75 = vector.shape_cast %74 : vector<32x16xf32> to vector<1x32x16xf32>
    %cst_40 = arith.constant dense<0.000000e+00> : vector<1xf32>
    %76 = vector.multi_reduction <add>, %75, %cst_40 [1, 2] : vector<1x32x16xf32> to vector<1xf32>
    %77 = vector.shape_cast %76 : vector<1xf32> to vector<1x1x1xf32>
    %78 = vector.extract %77[0, 0, 0] : f32 from vector<1x1x1xf32>
    %cst_41 = arith.constant 5.120000e+02 : f32
    %79 = arith.divf %73, %cst_41 : f32
    %cst_42 = arith.constant 5.120000e+02 : f32
    %80 = arith.divf %78, %cst_42 : f32
    %81 = arith.mulf %79, %79 : f32
    %82 = arith.subf %80, %81 : f32
    %cst_43 = arith.constant 0.000000e+00 : f32
    %83 = arith.maximumf %82, %cst_43 : f32
    %cst_44 = arith.constant 9.99999993E-9 : f32
    %84 = arith.addf %83, %cst_44 : f32
    %85 = math.rsqrt %84 : f32
    %c0_45 = arith.constant 0 : index
    %c0_46 = arith.constant 0 : index
    %86 = vector.load %arg5[%c0_45, %c0_46] : memref<8x32xf32, #tpu.memory_space<vmem>>, vector<8x32xf32>
    %cst_47 = arith.constant dense<0.000000e+00> : vector<8x16xf32>
    %87 = tpu.matmul %86, %69, %cst_47 {dimension_numbers = #tpu.dot_dimension_numbers<[1], [0], [0], [1], [0, 0, 1, 1], [], []>} : vector<8x32xf32>, vector<32x16xf32>, vector<8x16xf32> -> vector<8x16xf32>
    %c0_48 = arith.constant 0 : index
    %c0_49 = arith.constant 0 : index
    %88 = vector.load %arg6[%c0_48, %c0_49] : memref<8x2xf32, #tpu.memory_space<vmem>>, vector<8x1xf32>
    %89 = arith.mulf %79, %85 : f32
    %c0_50 = arith.constant 0 : index
    %c1_51 = arith.constant 1 : index
    %90 = vector.load %arg6[%c0_50, %c1_51] : memref<8x2xf32, #tpu.memory_space<vmem>>, vector<8x1xf32>
    %91 = vector.broadcast %89 : f32 to vector<8x1xf32>
    %92 = arith.mulf %91, %90 : vector<8x1xf32>
    %93 = arith.subf %88, %92 : vector<8x1xf32>
    %94 = vector.broadcast %85 : f32 to vector<8x16xf32>
    %95 = arith.mulf %87, %94 : vector<8x16xf32>
    %96 = vector.broadcast %93 : vector<8x1xf32> to vector<8x16xf32>
    %97 = arith.addf %95, %96 : vector<8x16xf32>
    %98 = vector.extract_strided_slice %97 {offsets = [0, 0], sizes = [4, 16], strides = [1, 1]} : vector<8x16xf32> to vector<4x16xf32>
    %c0_52 = arith.constant 0 : index
    %c0_53 = arith.constant 0 : index
    %c0_54 = arith.constant 0 : index
    %99 = vector.load %arg7[%c0_52, %c0_53, %c0_54] : memref<1x4x16xf32, #tpu.memory_space<vmem>>, vector<1x4x16xf32>
    %100 = vector.shape_cast %99 : vector<1x4x16xf32> to vector<4x16xf32>
    %101 = vector.shape_cast %98 : vector<4x16xf32> to vector<1x4x16xf32>
    tpu.vector_store %arg7[%c0_52, %c0_53, %c0_54], %101 {strides = array<i32>} : memref<1x4x16xf32, #tpu.memory_space<vmem>>, vector<1x4x16xf32>,
    %102 = vector.extract_strided_slice %97 {offsets = [4, 0], sizes = [4, 16], strides = [1, 1]} : vector<8x16xf32> to vector<4x16xf32>
    %c0_55 = arith.constant 0 : index
    %c0_56 = arith.constant 0 : index
    %c0_57 = arith.constant 0 : index
    %103 = vector.load %arg8[%c0_55, %c0_56, %c0_57] : memref<1x4x16xf32, #tpu.memory_space<vmem>>, vector<1x4x16xf32>
    %104 = vector.shape_cast %103 : vector<1x4x16xf32> to vector<4x16xf32>
    %105 = vector.shape_cast %102 : vector<4x16xf32> to vector<1x4x16xf32>
    tpu.vector_store %arg8[%c0_55, %c0_56, %c0_57], %105 {strides = array<i32>} : memref<1x4x16xf32, #tpu.memory_space<vmem>>, vector<1x4x16xf32>,
    return
  }
  func.func @transform_0(%arg0: i32) -> (i32, i32, i32) {
    %c0_i32 = arith.constant 0 : i32
    %c0_i32_0 = arith.constant 0 : i32
    %c0_i32_1 = arith.constant 0 : i32
    return %arg0, %c0_i32, %c0_i32_0 : i32, i32, i32
  }
  func.func @transform_1(%arg0: i32) -> (i32, i32) {
    %c0_i32 = arith.constant 0 : i32
    %c0_i32_0 = arith.constant 0 : i32
    %c0_i32_1 = arith.constant 0 : i32
    return %c0_i32, %c0_i32_0 : i32, i32
  }
  func.func @transform_2(%arg0: i32) -> (i32, i32) {
    %c0_i32 = arith.constant 0 : i32
    %c0_i32_0 = arith.constant 0 : i32
    %c0_i32_1 = arith.constant 0 : i32
    return %c0_i32, %c0_i32_0 : i32, i32
  }
  func.func @transform_3(%arg0: i32) -> (i32, i32) {
    %c0_i32 = arith.constant 0 : i32
    %c0_i32_0 = arith.constant 0 : i32
    %c0_i32_1 = arith.constant 0 : i32
    return %c0_i32, %c0_i32_0 : i32, i32
  }
  func.func @transform_4(%arg0: i32) -> (i32, i32) {
    %c0_i32 = arith.constant 0 : i32
    %c0_i32_0 = arith.constant 0 : i32
    %c0_i32_1 = arith.constant 0 : i32
    return %c0_i32, %c0_i32_0 : i32, i32
  }
  func.func @transform_5(%arg0: i32) -> (i32, i32) {
    %c0_i32 = arith.constant 0 : i32
    %c0_i32_0 = arith.constant 0 : i32
    %c0_i32_1 = arith.constant 0 : i32
    return %c0_i32, %c0_i32_0 : i32, i32
  }
  func.func @transform_6(%arg0: i32) -> (i32, i32, i32) {
    %c0_i32 = arith.constant 0 : i32
    %c0_i32_0 = arith.constant 0 : i32
    %c0_i32_1 = arith.constant 0 : i32
    return %arg0, %c0_i32, %c0_i32_0 : i32, i32, i32
  }
  func.func @transform_7(%arg0: i32) -> (i32, i32, i32) {
    %c0_i32 = arith.constant 0 : i32
    %c0_i32_0 = arith.constant 0 : i32
    %c0_i32_1 = arith.constant 0 : i32
    return %arg0, %c0_i32, %c0_i32_0 : i32, i32, i32
  }
}

</mosaic_0001>

<llo_original>
// kernel: tpu_custom_call.1
$region0: #{tpu_custom_call.1}
  #allocation0 [shape = 'u32[]', space=smem, size = 0x4, offset = 0x4, fixed_abs, tag = 'smem constant byte address 0x4 - core index']
  #allocation1 [shape = 'u32[72,128]{1,0:T(1,128)}', space=vmem, size = 0x9000, scoped, tag = 'internal scratch']
  #allocation2 [shape = 'f32[32,18]{1,0:T(8,128)}', space=vmem, size = 0x4000, scoped, tag = 'scratch operand']
  %s0 = inlined_call_operand.vmem [shape: f32[2,4,16], index: 0, kind: input, shape index: {}]
  %s1 = inlined_call_operand.vmem [shape: f32[32,4], index: 1, kind: input, shape index: {}]
  %s2 = inlined_call_operand.vmem [shape: f32[32,6], index: 2, kind: input, shape index: {}]
  %s3 = inlined_call_operand.vmem [shape: f32[32,3], index: 3, kind: input, shape index: {}]
  %s4 = inlined_call_operand.vmem [shape: f32[8,32], index: 4, kind: input, shape index: {}]
  %s5 = inlined_call_operand.vmem [shape: f32[8,2], index: 5, kind: input, shape index: {}]
  %s6 = inlined_call_operand.hbm [shape: f32[2,4,16], index: 6, kind: output, shape index: {0}]
  %s7 = inlined_call_operand.hbm [shape: f32[2,4,16], index: 7, kind: output, shape index: {1}]
  %8 = xla_tuple %s6, %s7
  %s9 = sld [smem:[#allocation0]]
  $region65: #{tpu_custom_call.1} parent=0
    _
  %s11 = ssub.s32 1, %s9
  %s12 = scalar_select 0, %s11, %s9
  $region1: #{tpu_custom_call.1} parent=0
    #allocation3 [shape = 'u8[4096]{0}', space=vmem, size = 0x1000, scoped, tag = 'output window, operand 0']
    #allocation4 [shape = 's32[2]{0}', space=sflag, size = 0x8, scoped, tag = 'scoped memory for tpu_custom_call.1']
    #allocation5 [shape = 'u8[4096]{0}', space=vmem, size = 0x1000, scoped, tag = 'output window, operand 1']
    #allocation6 [shape = 's32[2]{0}', space=sflag, size = 0x8, scoped, tag = 'scoped memory for tpu_custom_call.1']
    %13 = vsyncpa [#allocation4], 0
    %s14 = scalar_lea.sflag [#allocation4], 1
    %15 = vsyncpa %s14, 0
    %16 = vsyncpa [#allocation6], 0
    %s17 = scalar_lea.sflag [#allocation6], 1
    %18 = vsyncpa %s17, 0
    loop: start=0, step=1, limit=4
    $region2: #{tpu_custom_call.1} parent=1 // loop_pre_header
      _
    $region3: #{tpu_custom_call.1} parent=1 // loop_header
      %s20 = sphi 0, %s24
      %p21 = scmp.ge.s32.totalorder %s20, 4
      %s30 = sphi 0, %s32
      %s33 = sphi 0, %s30
      %s34 = sphi 0, %s33
      %s50 = sphi 0, %s34
      %s54 = sphi 0, %s54
      %s56 = sphi 0, %s54
      %s57 = sphi 0, %s56
      %s71 = sphi 0, %s57
      %s75 = sphi 0, %s75
      %s77 = sphi 0, %s75
      %s78 = sphi 0, %s77
      %s92 = sphi 0, %s78
      %s96 = sphi 0, %s96
      %s98 = sphi 0, %s96
      %s99 = sphi 0, %s98
      %s113 = sphi 0, %s99
      %s117 = sphi 0, %s117
      %s119 = sphi 0, %s117
      %s120 = sphi 0, %s119
      %s134 = sphi 0, %s120
      %s138 = sphi 0, %s138
      %s140 = sphi 0, %s138
      %s141 = sphi 0, %s140
      %s155 = sphi 0, %s141
      %s161 = sphi 0, %s163
      %s164 = sphi 0, %s161
      %s165 = sphi 0, %s164
      %s181 = sphi 0, %s165
      %s187 = sphi 0, %s189
      %s190 = sphi 0, %s187
      %s191 = sphi 0, %s190
      %s207 = sphi 0, %s191
    $region4: #{tpu_custom_call.1} parent=1 // loop_header_branch
      %23 = sbr.rel (%p21) target = $region8
    $region5: #{tpu_custom_call.1} parent=1 // loop_body
      %s25 = ssub.s32 %s20, 1
      %s26 = ssub.s32 %s20, 2
      %s27 = sadd.s32 %s20, 1
      %s28 = ssub.s32 %s20, %s27
      %p29 = scmp.eq.s32.totalorder %s28, 0
      %s31 = sadd.s32 %s30, 1
      %s32 = scalar_select %p29, %s30, %s31
      %p35 = pneg %p29
      %p36 = scmp.eq.s32.totalorder %s20, 1
      %p37 = por %p35, %p36
      %p38 = scmp.ne.s32.totalorder %s30, %s33
      %p39 = scmp.eq.s32.totalorder %s20, 0
      %p40 = por %p38, %p39
      %p41 = scmp.ne.s32.totalorder %s30, %s33
      %p42 = scmp.eq.s32.totalorder %s25, 1
      %p43 = por %p41, %p42
      %p44 = scmp.ne.s32.totalorder %s33, %s34
      %p45 = scmp.eq.s32.totalorder %s25, 0
      %p46 = por %p44, %p45
      %p47 = scmp.ne.s32.totalorder %s33, %s34
      %p48 = scmp.eq.s32.totalorder %s26, 1
      %p49 = por %p47, %p48
      %p51 = scmp.ne.s32.totalorder %s34, %s50
      %p52 = scmp.eq.s32.totalorder %s26, 0
      %p53 = por %p51, %p52
      %s55 = sadd.s32 %s54, 1
      %p58 = scmp.eq.s32.totalorder %s20, 1
      %p59 = scmp.ne.s32.totalorder %s54, %s56
      %p60 = scmp.eq.s32.totalorder %s20, 0
      %p61 = por %p59, %p60
      %p62 = scmp.ne.s32.totalorder %s54, %s56
      %p63 = scmp.eq.s32.totalorder %s25, 1
      %p64 = por %p62, %p63
      %p65 = scmp.ne.s32.totalorder %s56, %s57
      %p66 = scmp.eq.s32.totalorder %s25, 0
      %p67 = por %p65, %p66
      %p68 = scmp.ne.s32.totalorder %s56, %s57
      %p69 = scmp.eq.s32.totalorder %s26, 1
      %p70 = por %p68, %p69
      %p72 = scmp.ne.s32.totalorder %s57, %s71
      %p73 = scmp.eq.s32.totalorder %s26, 0
      %p74 = por %p72, %p73
      %s76 = sadd.s32 %s75, 1
      %p79 = scmp.eq.s32.totalorder %s20, 1
      %p80 = scmp.ne.s32.totalorder %s75, %s77
      %p81 = scmp.eq.s32.totalorder %s20, 0
      %p82 = por %p80, %p81
      %p83 = scmp.ne.s32.totalorder %s75, %s77
      %p84 = scmp.eq.s32.totalorder %s25, 1
      %p85 = por %p83, %p84
      %p86 = scmp.ne.s32.totalorder %s77, %s78
      %p87 = scmp.eq.s32.totalorder %s25, 0
      %p88 = por %p86, %p87
      %p89 = scmp.ne.s32.totalorder %s77, %s78
      %p90 = scmp.eq.s32.totalorder %s26, 1
      %p91 = por %p89, %p90
      %p93 = scmp.ne.s32.totalorder %s78, %s92
      %p94 = scmp.eq.s32.totalorder %s26, 0
      %p95 = por %p93, %p94
      %s97 = sadd.s32 %s96, 1
      %p100 = scmp.eq.s32.totalorder %s20, 1
      %p101 = scmp.ne.s32.totalorder %s96, %s98
      %p102 = scmp.eq.s32.totalorder %s20, 0
      %p103 = por %p101, %p102
      %p104 = scmp.ne.s32.totalorder %s96, %s98
      %p105 = scmp.eq.s32.totalorder %s25, 1
      %p106 = por %p104, %p105
      %p107 = scmp.ne.s32.totalorder %s98, %s99
      %p108 = scmp.eq.s32.totalorder %s25, 0
      %p109 = por %p107, %p108
      %p110 = scmp.ne.s32.totalorder %s98, %s99
      %p111 = scmp.eq.s32.totalorder %s26, 1
      %p112 = por %p110, %p111
      %p114 = scmp.ne.s32.totalorder %s99, %s113
      %p115 = scmp.eq.s32.totalorder %s26, 0
      %p116 = por %p114, %p115
      %s118 = sadd.s32 %s117, 1
      %p121 = scmp.eq.s32.totalorder %s20, 1
      %p122 = scmp.ne.s32.totalorder %s117, %s119
      %p123 = scmp.eq.s32.totalorder %s20, 0
      %p124 = por %p122, %p123
      %p125 = scmp.ne.s32.totalorder %s117, %s119
      %p126 = scmp.eq.s32.totalorder %s25, 1
      %p127 = por %p125, %p126
      %p128 = scmp.ne.s32.totalorder %s119, %s120
      %p129 = scmp.eq.s32.totalorder %s25, 0
      %p130 = por %p128, %p129
      %p131 = scmp.ne.s32.totalorder %s119, %s120
      %p132 = scmp.eq.s32.totalorder %s26, 1
      %p133 = por %p131, %p132
      %p135 = scmp.ne.s32.totalorder %s120, %s134
      %p136 = scmp.eq.s32.totalorder %s26, 0
      %p137 = por %p135, %p136
      %s139 = sadd.s32 %s138, 1
      %p142 = scmp.eq.s32.totalorder %s20, 1
      %p143 = scmp.ne.s32.totalorder %s138, %s140
      %p144 = scmp.eq.s32.totalorder %s20, 0
      %p145 = por %p143, %p144
      %p146 = scmp.ne.s32.totalorder %s138, %s140
      %p147 = scmp.eq.s32.totalorder %s25, 1
      %p148 = por %p146, %p147
      %p149 = scmp.ne.s32.totalorder %s140, %s141
      %p150 = scmp.eq.s32.totalorder %s25, 0
      %p151 = por %p149, %p150
      %p152 = scmp.ne.s32.totalorder %s140, %s141
      %p153 = scmp.eq.s32.totalorder %s26, 1
      %p154 = por %p152, %p153
      %p156 = scmp.ne.s32.totalorder %s141, %s155
      %p157 = scmp.eq.s32.totalorder %s26, 0
      %p158 = por %p156, %p157
      %s159 = ssub.s32 %s20, %s27
      %p160 = scmp.eq.s32.totalorder %s159, 0
      %s162 = sadd.s32 %s161, 1
      %s163 = scalar_select %p160, %s161, %s162
      %p166 = pneg %p160
      %p167 = scmp.eq.s32.totalorder %s20, 1
      %p168 = por %p166, %p167
      %p169 = scmp.ne.s32.totalorder %s161, %s164
      %p170 = scmp.eq.s32.totalorder %s20, 0
      %p171 = por %p169, %p170
      %p172 = scmp.ne.s32.totalorder %s161, %s164
      %p173 = scmp.eq.s32.totalorder %s25, 1
      %p174 = por %p172, %p173
      %p175 = scmp.ne.s32.totalorder %s164, %s165
      %p176 = scmp.eq.s32.totalorder %s25, 0
      %p177 = por %p175, %p176
      %p178 = scmp.ne.s32.totalorder %s164, %s165
      %p179 = scmp.eq.s32.totalorder %s26, 1
      %p180 = por %p178, %p179
      %p182 = scmp.ne.s32.totalorder %s165, %s181
      %p183 = scmp.eq.s32.totalorder %s26, 0
      %p184 = por %p182, %p183
      %s185 = ssub.s32 %s20, %s27
      %p186 = scmp.eq.s32.totalorder %s185, 0
      %s188 = sadd.s32 %s187, 1
      %s189 = scalar_select %p186, %s187, %s188
      %p192 = pneg %p186
      %p193 = scmp.eq.s32.totalorder %s20, 1
      %p194 = por %p192, %p193
      %p195 = scmp.ne.s32.totalorder %s187, %s190
      %p196 = scmp.eq.s32.totalorder %s20, 0
      %p197 = por %p195, %p196
      %p198 = scmp.ne.s32.totalorder %s187, %s190
      %p199 = scmp.eq.s32.totalorder %s25, 1
      %p200 = por %p198, %p199
      %p201 = scmp.ne.s32.totalorder %s190, %s191
      %p202 = scmp.eq.s32.totalorder %s25, 0
      %p203 = por %p201, %p202
      %p204 = scmp.ne.s32.totalorder %s190, %s191
      %p205 = scmp.eq.s32.totalorder %s26, 1
      %p206 = por %p204, %p205
      %p208 = scmp.ne.s32.totalorder %s191, %s207
      %p209 = scmp.eq.s32.totalorder %s26, 0
      %p210 = por %p208, %p209
      %p211 = scmp.le.s32.totalorder 1, %s20
      %p212 = scmp.lt.s32.totalorder %s20, 3
      %p213 = pnand %p211, %p212
      %p214 = pneg %p213
      // Predicated region
      $region9: #{tpu_custom_call.1} parent=5 // pred_check
        _
      $region10: #{tpu_custom_call.1} parent=5 // pred_check_branch
        %216 = sbr.rel (%p213) target = $region12
      $region11: #{tpu_custom_call.1} parent=5 // pred_region
        %s217 = ssub.s32 %s20, 1
        // Predicated region
        $region13: #{tpu_custom_call.1} parent=11 // pred_check
          %p218 = pneg %p67
        $region14: #{tpu_custom_call.1} parent=11 // pred_check_branch
          %220 = sbr.rel (%p218) target = $region16
        $region15: #{tpu_custom_call.1} parent=11 // pred_region
          _
        $region16: #{tpu_custom_call.1} parent=11 // pred_fallthru
          _
        // Predicated region
        $region17: #{tpu_custom_call.1} parent=11 // pred_check
          %p221 = pneg %p88
        $region18: #{tpu_custom_call.1} parent=11 // pred_check_branch
          %223 = sbr.rel (%p221) target = $region20
        $region19: #{tpu_custom_call.1} parent=11 // pred_region
          _
        $region20: #{tpu_custom_call.1} parent=11 // pred_fallthru
          _
        // Predicated region
        $region21: #{tpu_custom_call.1} parent=11 // pred_check
          %p224 = pneg %p109
        $region22: #{tpu_custom_call.1} parent=11 // pred_check_branch
          %226 = sbr.rel (%p224) target = $region24
        $region23: #{tpu_custom_call.1} parent=11 // pred_region
          _
        $region24: #{tpu_custom_call.1} parent=11 // pred_fallthru
          _
        // Predicated region
        $region25: #{tpu_custom_call.1} parent=11 // pred_check
          %p227 = pneg %p130
        $region26: #{tpu_custom_call.1} parent=11 // pred_check_branch
          %229 = sbr.rel (%p227) target = $region28
        $region27: #{tpu_custom_call.1} parent=11 // pred_region
          _
        $region28: #{tpu_custom_call.1} parent=11 // pred_fallthru
          _
        // Predicated region
        $region29: #{tpu_custom_call.1} parent=11 // pred_check
          %p230 = pneg %p151
        $region30: #{tpu_custom_call.1} parent=11 // pred_check_branch
          %232 = sbr.rel (%p230) target = $region32
        $region31: #{tpu_custom_call.1} parent=11 // pred_region
          _
        $region32: #{tpu_custom_call.1} parent=11 // pred_fallthru
          _
      $region12: #{tpu_custom_call.1} parent=5 // pred_fallthru
        _
      %p233 = scmp.lt.s32.totalorder %s20, 2
      // Predicated region
      $region33: #{tpu_custom_call.1} parent=5 // pred_check
        %p234 = pneg %p233
      $region34: #{tpu_custom_call.1} parent=5 // pred_check_branch
        %236 = sbr.rel (%p234) target = $region36
      $region35: #{tpu_custom_call.1} parent=5 // pred_region
        // Predicated region
        $region37: #{tpu_custom_call.1} parent=35 // pred_check
          %p237 = pneg %p40
        $region38: #{tpu_custom_call.1} parent=35 // pred_check_branch
          %239 = sbr.rel (%p237) target = $region40
        $region39: #{tpu_custom_call.1} parent=35 // pred_region
          %p240 = scmp.lt.s32.totalorder %s20, 1
          %s241 = scalar_select %p240, %s20, 1
          %s242 = smul.addr %s241, 4
          %s243 = scalar_lea.vmem %s0, %s242
        $region40: #{tpu_custom_call.1} parent=35 // pred_fallthru
          _
      $region36: #{tpu_custom_call.1} parent=5 // pred_fallthru
        _
      %p244 = scmp.le.s32.totalorder 1, %s20
      %p245 = scmp.lt.s32.totalorder %s20, 3
      %p246 = pnand %p244, %p245
      %p247 = pneg %p246
      // Predicated region
      $region41: #{tpu_custom_call.1} parent=5 // pred_check
        _
      $region42: #{tpu_custom_call.1} parent=5 // pred_check_branch
        %249 = sbr.rel (%p246) target = $region44
      $region43: #{tpu_custom_call.1} parent=5 // pred_region
        %s250 = ssub.s32 %s20, 1
        %p251 = scmp.lt.s32.totalorder %s25, 1
        %s252 = scalar_select %p251, %s25, 1
        %s253 = smul.addr %s252, 4
        %s254 = scalar_lea.vmem %s0, %s253
        %p255 = pneg %p46
        %p256 = pneg %p43
        %p257 = pneg %p67
        %p258 = pneg %p64
        %p259 = pneg %p88
        %p260 = pneg %p85
        %p261 = pneg %p109
        %p262 = pneg %p106
        %p263 = pneg %p130
        %p264 = pneg %p127
        %p265 = pneg %p151
        %p266 = pneg %p148
        %p267 = pneg %p177
        %p268 = pneg %p174
        %s269 = sand.u32 %s164, 1
        %s270 = scalar_lea.sflag [#allocation4], %s269
        %s271 = sand.u32 %s164, 1
        %s272 = smul.addr %s271, 4
        %s273 = scalar_lea.vmem [#allocation3], %s272
        %p274 = pneg %p203
        %p275 = pneg %p200
        %s276 = sand.u32 %s190, 1
        %s277 = scalar_lea.sflag [#allocation6], %s276
        %s278 = sand.u32 %s190, 1
        %s279 = smul.addr %s278, 4
        %s280 = scalar_lea.vmem [#allocation5], %s279
        %p281 = scmp.lt.s32.totalorder %s25, 1
        %s282 = scalar_select %p281, %s25, 1
        %s283 = smul.addr %s282, 4
        %s284 = scalar_lea.vmem %s0, %s283
        %v285 = vld [vmem:[%s2] sm:$0xff]
        %v286 = vld [vmem:[%s2 + $0x8] sm:$0xff]
        %v287 = vld [vmem:[%s2 + $0x10] sm:$0xff]
        %v288 = vld [vmem:[%s2 + $0x18] sm:$0xff]
        %v289 = vld [vmem:[%s284] sm:$0xf]
        %v290 = vld [vmem:[%s1] sm:$0xff]
        %v291 = vld [vmem:[%s1 + $0x8] sm:$0xff]
        %v292 = vld [vmem:[%s1 + $0x10] sm:$0xff]
        %v293 = vld [vmem:[%s1 + $0x18] sm:$0xff]
        %295 = vset.pattern.permute.xlu0 0
        %296 = vperm.xlu0 %295, %v285
        %v297 = vpop.permute.xlu0 %296
        %300 = vset.pattern.permute.xlu0 0
        %301 = vperm.xlu0 %300, %v286
        %v302 = vpop.permute.xlu0 %301
        %305 = vset.pattern.permute.xlu0 0
        %306 = vperm.xlu0 %305, %v287
        %v307 = vpop.permute.xlu0 %306
        %310 = vset.pattern.permute.xlu0 0
        %311 = vperm.xlu0 %310, %v288
        %v312 = vpop.permute.xlu0 %311
        %vm314 = vcmask 31744
        %v316 = vsel %vm314, %v290, 0
        %v319 = vsel %vm314, %v291, 0
        %v322 = vsel %vm314, %v292, 0
        %v325 = vsel %vm314, %v293, 0
        %vm327 = vcmask 1043456
        %v329 = vsel %vm327, %v289, 0
        %331 = vmatpush.msra.mxu0 0.0
        %332 = vmatpush.msra.mxu0 0.0
        %333 = vmatpush.msra.mxu0 0.0
        %334 = vmatpush.msra.mxu0 0.0
        %335 = vmatpush.msra.mxu0 0.0
        %336 = vmatpush.msra.mxu0 0.0
        %337 = vmatpush.msra.mxu0 0.0
        %338 = vmatpush.msra.mxu0 0.0
        %339 = vmatpush.msra.mxu0 0.0
        %340 = vmatpush.msra.mxu0 0.0
        %341 = vmatpush.msra.mxu0 0.0
        %342 = vmatpush.msra.mxu0 0.0
        %343 = vmatpush.msra.mxu0 0.0
        %344 = vmatpush.msra.mxu0 0.0
        %345 = vmatpush.msra.mxu0 0.0
        %346 = vmatpush.msra.mxu0 %v329
        %347 = vmatmul.f32.gmra.mxu0 %v316
        %v348 = vpop.f32.mrf.mxu0
        %v349 = vadd.f32 %v297, %v348
        %350 = vmatmul.f32.gmra.mxu0 %v319
        %v351 = vpop.f32.mrf.mxu0
        %v352 = vadd.f32 %v302, %v351
        %353 = vmatmul.f32.gmra.mxu0 %v322
        %v354 = vpop.f32.mrf.mxu0
        %v355 = vadd.f32 %v307, %v354
        %356 = vmatmul.f32.gmra.mxu0 %v325
        %v357 = vpop.f32.mrf.mxu0
        %v358 = vadd.f32 %v312, %v357
        %359 = vdwg.mxu0
        %vm360 = vcmp.ge.f32.partialorder %v349, 0.0
        %vm361 = vcmp.ge.f32.partialorder %v352, 0.0
        %vm362 = vcmp.ge.f32.partialorder %v355, 0.0
        %vm363 = vcmp.ge.f32.partialorder %v358, 0.0
        %364 = vset.pattern.permute.xlu0 4
        %365 = vperm.xlu0 %364, %v285
        %v366 = vpop.permute.xlu0 %365
        %368 = vset.pattern.permute.xlu0 4
        %369 = vperm.xlu0 %368, %v286
        %v370 = vpop.permute.xlu0 %369
        %372 = vset.pattern.permute.xlu0 4
        %373 = vperm.xlu0 %372, %v287
        %v374 = vpop.permute.xlu0 %373
        %376 = vset.pattern.permute.xlu0 4
        %377 = vperm.xlu0 %376, %v288
        %v378 = vpop.permute.xlu0 %377
        %v380 = vmul.f32 %v366, %v349
        %v381 = vmul.f32 %v370, %v352
        %v382 = vmul.f32 %v374, %v355
        %v383 = vmul.f32 %v378, %v358
        %v384 = vsel %vm360, %v349, %v380
        %v385 = vsel %vm361, %v352, %v381
        %v386 = vsel %vm362, %v355, %v382
        %v387 = vsel %vm363, %v358, %v383
        %vm388 = vcmask 130048
        %v389 = vsel %vm388, %v384, 0.0
        %v390 = vsel %vm388, %v385, 0.0
        %v391 = vadd.f32 %v389, %v390
        %v392 = vsel %vm388, %v386, 0.0
        %v393 = vadd.f32 %v391, %v392
        %v394 = vsel %vm388, %v387, 0.0
        %v395 = vadd.f32 %v393, %v394
        %396 = vadd.xlane.f32.xlu0 %v395
        %v397 = vpop.xlane.xlu0 %396
        %v398 = vrot.slane %v397, 4
        %v399 = vadd.f32 %v397, %v398
        %v400 = vrot.slane %v399, 2
        %v401 = vadd.f32 %v399, %v400
        %v402 = vrot.slane %v401, 1
        %v403 = vadd.f32 %v401, %v402
        %s404 = vtos %v403
        %v405 = vmul.f32 %v384, %v384
        %v406 = vmul.f32 %v385, %v385
        %v407 = vmul.f32 %v386, %v386
        %v408 = vmul.f32 %v387, %v387
        %v409 = vsel %vm388, %v405, 0.0
        %v410 = vsel %vm388, %v406, 0.0
        %v411 = vadd.f32 %v409, %v410
        %v412 = vsel %vm388, %v407, 0.0
        %v413 = vadd.f32 %v411, %v412
        %v414 = vsel %vm388, %v408, 0.0
        %v415 = vadd.f32 %v413, %v414
        %416 = vadd.xlane.f32.xlu0 %v415
        %v417 = vpop.xlane.xlu0 %416
        %v418 = vrot.slane %v417, 4
        %v419 = vadd.f32 %v417, %v418
        %v420 = vrot.slane %v419, 2
        %v421 = vadd.f32 %v419, %v420
        %v422 = vrot.slane %v421, 1
        %v423 = vadd.f32 %v421, %v422
        %s424 = vtos %v423
        %v425 = vrcp.pop 512.0
        %v426 = vmul.f32 512.0, %v425
        %v427 = vsub.f32 1.0, %v426
        %v428 = vmul.f32 %v425, %v427
        %v429 = vadd.f32 %v425, %v428
        %vm430 = vweird.f32 %v425
        %v431 = vsel %vm430, %v425, %v429
        %s432 = vtos %v431
        %s433 = smul.f32 %s404, %s432
        %v434 = vrcp.pop 512.0
        %v435 = vmul.f32 512.0, %v434
        %v436 = vsub.f32 1.0, %v435
        %v437 = vmul.f32 %v434, %v436
        %v438 = vadd.f32 %v434, %v437
        %vm439 = vweird.f32 %v434
        %v440 = vsel %vm439, %v434, %v438
        %s441 = vtos %v440
        %s442 = smul.f32 %s424, %s441
        %s443 = smul.f32 %s433, %s433
        %s444 = ssub.f32 %s442, %s443
        %s445 = smax.f32 %s444, 0.0
        %s446 = sadd.f32 %s445, 1e-08
        %v447 = vstv %s446
        %v448 = vrsqrt.pop %v447
        %v449 = vmul.f32 %v448, %v447
        %v450 = vmul.f32 %v449, %v448
        %v451 = vmul.f32 0.5, %v450
        %v452 = vsub.f32 1.5, %v451
        %v453 = vmul.f32 %v448, %v452
        %vm454 = vweird.f32 %v447
        %vm455 = vweird.f32 %v448
        %vm456 = vmor %vm454, %vm455
        %v457 = vsel %vm456, %v448, %v453
        %s458 = vtos %v457
        %v459 = vstv %s458
        %v460 = vmul.f32 %v285, %v459
        %v461 = vmul.f32 %v286, %v459
        %v462 = vmul.f32 %v287, %v459
        %v463 = vmul.f32 %v288, %v459
        %v464 = vstv %s433
        %v465 = vmul.f32 %v464, %v460
        %v466 = vmul.f32 %v464, %v461
        %v467 = vmul.f32 %v464, %v462
        %v468 = vmul.f32 %v464, %v463
        %473 = vrot.lane.b32.xlu0 %v465, 1
        %v474 = vpop.permute.xlu0 %473
        %475 = vrot.lane.b32.xlu0 %v466, 1
        %v476 = vpop.permute.xlu0 %475
        %477 = vrot.lane.b32.xlu0 %v467, 1
        %v478 = vpop.permute.xlu0 %477
        %479 = vrot.lane.b32.xlu0 %v468, 1
        %v480 = vpop.permute.xlu0 %479
        %v485 = vsub.f32 %v285, %v474
        %v486 = vsub.f32 %v286, %v476
        %v487 = vsub.f32 %v287, %v478
        %v488 = vsub.f32 %v288, %v480
        %vm489 = vcmask 7168
        %490 = vst.msk [vmem:[#allocation2] sm:$0xff] %vm489, 0.0
        %491 = vst.msk [vmem:[#allocation2 + $0x8] sm:$0xff] %vm489, 0.0
        %492 = vst.msk [vmem:[#allocation2 + $0x10] sm:$0xff] %vm489, 0.0
        %493 = vst.msk [vmem:[#allocation2 + $0x18] sm:$0xff] %vm489, 0.0
        %vm494 = vcmask 146568
        %495 = vst.msk [vmem:[#allocation2] sm:$0xff] %vm494, 0.0
        %496 = vst.msk [vmem:[#allocation2 + $0x8] sm:$0xff] %vm494, 0.0
        %497 = vst.msk [vmem:[#allocation2 + $0x10] sm:$0xff] %vm494, 0.0
        %498 = vst.msk [vmem:[#allocation2 + $0x18] sm:$0xff] %vm494, 0.0
        %500 = vset.pattern.permute.xlu0 1
        %501 = vperm.xlu0 %500, %v460
        %v502 = vpop.permute.xlu0 %501
        %505 = vset.pattern.permute.xlu0 1
        %506 = vperm.xlu0 %505, %v461
        %v507 = vpop.permute.xlu0 %506
        %510 = vset.pattern.permute.xlu0 1
        %511 = vperm.xlu0 %510, %v462
        %v512 = vpop.permute.xlu0 %511
        %515 = vset.pattern.permute.xlu0 1
        %516 = vperm.xlu0 %515, %v463
        %v517 = vpop.permute.xlu0 %516
        %v519 = vmul.f32 %v384, %v502
        %v520 = vmul.f32 %v385, %v507
        %v521 = vmul.f32 %v386, %v512
        %v522 = vmul.f32 %v387, %v517
        %524 = vset.pattern.permute.xlu0 2
        %525 = vperm.xlu0 %524, %v485
        %v526 = vpop.permute.xlu0 %525
        %529 = vset.pattern.permute.xlu0 2
        %530 = vperm.xlu0 %529, %v486
        %v531 = vpop.permute.xlu0 %530
        %534 = vset.pattern.permute.xlu0 2
        %535 = vperm.xlu0 %534, %v487
        %v536 = vpop.permute.xlu0 %535
        %539 = vset.pattern.permute.xlu0 2
        %540 = vperm.xlu0 %539, %v488
        %v541 = vpop.permute.xlu0 %540
        %v543 = vadd.f32 %v519, %v526
        %v544 = vadd.f32 %v520, %v531
        %v545 = vadd.f32 %v521, %v536
        %v546 = vadd.f32 %v522, %v541
        %551 = vrot.lane.b32.xlu0 %v543, 1
        %v552 = vpop.permute.xlu0 %551
        %553 = vrot.lane.b32.xlu0 %v544, 1
        %v554 = vpop.permute.xlu0 %553
        %555 = vrot.lane.b32.xlu0 %v545, 1
        %v556 = vpop.permute.xlu0 %555
        %557 = vrot.lane.b32.xlu0 %v546, 1
        %v558 = vpop.permute.xlu0 %557
        %vm563 = vcmask 138248
        %564 = vst.msk [vmem:[#allocation2] sm:$0xff] %vm563, %v552
        %565 = vst.msk [vmem:[#allocation2 + $0x8] sm:$0xff] %vm563, %v554
        %566 = vst.msk [vmem:[#allocation2 + $0x10] sm:$0xff] %vm563, %v556
        %567 = vst.msk [vmem:[#allocation2 + $0x18] sm:$0xff] %vm563, %v558
        %568 = vset.pattern.permute.xlu0 3
        %569 = vperm.xlu0 %568, %v285
        %v570 = vpop.permute.xlu0 %569
        %572 = vset.pattern.permute.xlu0 3
        %573 = vperm.xlu0 %572, %v286
        %v574 = vpop.permute.xlu0 %573
        %576 = vset.pattern.permute.xlu0 3
        %577 = vperm.xlu0 %576, %v287
        %v578 = vpop.permute.xlu0 %577
        %580 = vset.pattern.permute.xlu0 3
        %581 = vperm.xlu0 %580, %v288
        %v582 = vpop.permute.xlu0 %581
        %v584 = vadd.f32 %v570, 0.0
        %v585 = vadd.f32 %v574, 0.0
        %v586 = vadd.f32 %v578, 0.0
        %v587 = vadd.f32 %v582, 0.0
        %v588 = vld [vmem:[%s3] sm:$0xff]
        %v589 = vld [vmem:[%s3 + $0x8] sm:$0xff]
        %v590 = vld [vmem:[%s3 + $0x10] sm:$0xff]
        %v591 = vld [vmem:[%s3 + $0x18] sm:$0xff]
        %v592 = vld [vmem:[#allocation2] sm:$0xff]
        %v593 = vld [vmem:[#allocation2 + $0x8] sm:$0xff]
        %v594 = vld [vmem:[#allocation2 + $0x10] sm:$0xff]
        %v595 = vld [vmem:[#allocation2 + $0x18] sm:$0xff]
        %597 = vset.pattern.permute.xlu0 0
        %598 = vperm.xlu0 %597, %v588
        %v599 = vpop.permute.xlu0 %598
        %602 = vset.pattern.permute.xlu0 0
        %603 = vperm.xlu0 %602, %v589
        %v604 = vpop.permute.xlu0 %603
        %607 = vset.pattern.permute.xlu0 0
        %608 = vperm.xlu0 %607, %v590
        %v609 = vpop.permute.xlu0 %608
        %612 = vset.pattern.permute.xlu0 0
        %613 = vperm.xlu0 %612, %v591
        %v614 = vpop.permute.xlu0 %613
        %v616 = vmul.f32 %v599, %v592
        %v617 = vmul.f32 %v604, %v593
        %v618 = vmul.f32 %v609, %v594
        %v619 = vmul.f32 %v614, %v595
        %v620 = vadd.f32 %v584, %v616
        %v621 = vadd.f32 %v585, %v617
        %v622 = vadd.f32 %v586, %v618
        %v623 = vadd.f32 %v587, %v619
        %624 = vset.pattern.permute.xlu0 1
        %625 = vperm.xlu0 %624, %v588
        %v626 = vpop.permute.xlu0 %625
        %628 = vset.pattern.permute.xlu0 1
        %629 = vperm.xlu0 %628, %v589
        %v630 = vpop.permute.xlu0 %629
        %632 = vset.pattern.permute.xlu0 1
        %633 = vperm.xlu0 %632, %v590
        %v634 = vpop.permute.xlu0 %633
        %636 = vset.pattern.permute.xlu0 1
        %637 = vperm.xlu0 %636, %v591
        %v638 = vpop.permute.xlu0 %637
        %v640 = vmul.f32 %v626, %v592
        %v641 = vmul.f32 %v630, %v593
        %v642 = vmul.f32 %v634, %v594
        %v643 = vmul.f32 %v638, %v595
        %648 = vrot.lane.b32.xlu0 %v640, 127
        %v649 = vpop.permute.xlu0 %648
        %650 = vrot.lane.b32.xlu0 %v641, 127
        %v651 = vpop.permute.xlu0 %650
        %652 = vrot.lane.b32.xlu0 %v642, 127
        %v653 = vpop.permute.xlu0 %652
        %654 = vrot.lane.b32.xlu0 %v643, 127
        %v655 = vpop.permute.xlu0 %654
        %v660 = vadd.f32 %v620, %v649
        %v661 = vadd.f32 %v621, %v651
        %v662 = vadd.f32 %v622, %v653
        %v663 = vadd.f32 %v623, %v655
        %664 = vset.pattern.permute.xlu0 2
        %665 = vperm.xlu0 %664, %v588
        %v666 = vpop.permute.xlu0 %665
        %668 = vset.pattern.permute.xlu0 2
        %669 = vperm.xlu0 %668, %v589
        %v670 = vpop.permute.xlu0 %669
        %672 = vset.pattern.permute.xlu0 2
        %673 = vperm.xlu0 %672, %v590
        %v674 = vpop.permute.xlu0 %673
        %676 = vset.pattern.permute.xlu0 2
        %677 = vperm.xlu0 %676, %v591
        %v678 = vpop.permute.xlu0 %677
        %v680 = vmul.f32 %v666, %v592
        %v681 = vmul.f32 %v670, %v593
        %v682 = vmul.f32 %v674, %v594
        %v683 = vmul.f32 %v678, %v595
        %688 = vrot.lane.b32.xlu0 %v680, 126
        %v689 = vpop.permute.xlu0 %688
        %690 = vrot.lane.b32.xlu0 %v681, 126
        %v691 = vpop.permute.xlu0 %690
        %692 = vrot.lane.b32.xlu0 %v682, 126
        %v693 = vpop.permute.xlu0 %692
        %694 = vrot.lane.b32.xlu0 %v683, 126
        %v695 = vpop.permute.xlu0 %694
        %v700 = vadd.f32 %v660, %v689
        %v701 = vadd.f32 %v661, %v691
        %v702 = vadd.f32 %v662, %v693
        %v703 = vadd.f32 %v663, %v695
        %vm704 = vcmp.ge.f32.partialorder %v700, 0.0
        %vm705 = vcmp.ge.f32.partialorder %v701, 0.0
        %vm706 = vcmp.ge.f32.partialorder %v702, 0.0
        %vm707 = vcmp.ge.f32.partialorder %v703, 0.0
        %708 = vset.pattern.permute.xlu0 5
        %709 = vperm.xlu0 %708, %v285
        %v710 = vpop.permute.xlu0 %709
        %712 = vset.pattern.permute.xlu0 5
        %713 = vperm.xlu0 %712, %v286
        %v714 = vpop.permute.xlu0 %713
        %716 = vset.pattern.permute.xlu0 5
        %717 = vperm.xlu0 %716, %v287
        %v718 = vpop.permute.xlu0 %717
        %720 = vset.pattern.permute.xlu0 5
        %721 = vperm.xlu0 %720, %v288
        %v722 = vpop.permute.xlu0 %721
        %v724 = vmul.f32 %v710, %v700
        %v725 = vmul.f32 %v714, %v701
        %v726 = vmul.f32 %v718, %v702
        %v727 = vmul.f32 %v722, %v703
        %v728 = vsel %vm704, %v700, %v724
        %v729 = vsel %vm705, %v701, %v725
        %v730 = vsel %vm706, %v702, %v726
        %v731 = vsel %vm707, %v703, %v727
        %v732 = vsel %vm388, %v728, 0.0
        %v733 = vsel %vm388, %v729, 0.0
        %v734 = vadd.f32 %v732, %v733
        %v735 = vsel %vm388, %v730, 0.0
        %v736 = vadd.f32 %v734, %v735
        %v737 = vsel %vm388, %v731, 0.0
        %v738 = vadd.f32 %v736, %v737
        %739 = vadd.xlane.f32.xlu0 %v738
        %v740 = vpop.xlane.xlu0 %739
        %v741 = vrot.slane %v740, 4
        %v742 = vadd.f32 %v740, %v741
        %v743 = vrot.slane %v742, 2
        %v744 = vadd.f32 %v742, %v743
        %v745 = vrot.slane %v744, 1
        %v746 = vadd.f32 %v744, %v745
        %s747 = vtos %v746
        %v748 = vmul.f32 %v728, %v728
        %v749 = vmul.f32 %v729, %v729
        %v750 = vmul.f32 %v730, %v730
        %v751 = vmul.f32 %v731, %v731
        %v752 = vsel %vm388, %v748, 0.0
        %v753 = vsel %vm388, %v749, 0.0
        %v754 = vadd.f32 %v752, %v753
        %v755 = vsel %vm388, %v750, 0.0
        %v756 = vadd.f32 %v754, %v755
        %v757 = vsel %vm388, %v751, 0.0
        %v758 = vadd.f32 %v756, %v757
        %759 = vadd.xlane.f32.xlu0 %v758
        %v760 = vpop.xlane.xlu0 %759
        %v761 = vrot.slane %v760, 4
        %v762 = vadd.f32 %v760, %v761
        %v763 = vrot.slane %v762, 2
        %v764 = vadd.f32 %v762, %v763
        %v765 = vrot.slane %v764, 1
        %v766 = vadd.f32 %v764, %v765
        %s767 = vtos %v766
        %v768 = vrcp.pop 512.0
        %v769 = vmul.f32 512.0, %v768
        %v770 = vsub.f32 1.0, %v769
        %v771 = vmul.f32 %v768, %v770
        %v772 = vadd.f32 %v768, %v771
        %vm773 = vweird.f32 %v768
        %v774 = vsel %vm773, %v768, %v772
        %s775 = vtos %v774
        %s776 = smul.f32 %s747, %s775
        %v777 = vrcp.pop 512.0
        %v778 = vmul.f32 512.0, %v777
        %v779 = vsub.f32 1.0, %v778
        %v780 = vmul.f32 %v777, %v779
        %v781 = vadd.f32 %v777, %v780
        %vm782 = vweird.f32 %v777
        %v783 = vsel %vm782, %v777, %v781
        %s784 = vtos %v783
        %s785 = smul.f32 %s767, %s784
        %s786 = smul.f32 %s776, %s776
        %s787 = ssub.f32 %s785, %s786
        %s788 = smax.f32 %s787, 0.0
        %s789 = sadd.f32 %s788, 1e-08
        %v790 = vstv %s789
        %v791 = vrsqrt.pop %v790
        %v792 = vmul.f32 %v791, %v790
        %v793 = vmul.f32 %v792, %v791
        %v794 = vmul.f32 0.5, %v793
        %v795 = vsub.f32 1.5, %v794
        %v796 = vmul.f32 %v791, %v795
        %vm797 = vweird.f32 %v790
        %vm798 = vweird.f32 %v791
        %vm799 = vmor %vm797, %vm798
        %v800 = vsel %vm799, %v791, %v796
        %s801 = vtos %v800
        %v802 = vld [vmem:[%s4] sm:$0xff]
        %vm803 = vcmask 261120
        %v805 = vsel %vm803, %v802, 0
        %807 = vmatpush.msra.mxu0 0.0
        %808 = vmatpush.msra.mxu0 0.0
        %809 = vmatpush.msra.mxu0 0.0
        %810 = vmatpush.msra.mxu0 0.0
        %811 = vmatpush.msra.mxu0 0.0
        %812 = vmatpush.msra.mxu0 0.0
        %813 = vmatpush.msra.mxu0 0.0
        %814 = vmatpush.msra.mxu0 0.0
        %815 = vmatpush.msra.mxu0 0.0
        %816 = vmatpush.msra.mxu0 0.0
        %817 = vmatpush.msra.mxu0 0.0
        %818 = vmatpush.msra.mxu0 0.0
        %819 = vmatpush.msra.mxu0 %v731
        %820 = vmatpush.msra.mxu0 %v730
        %821 = vmatpush.msra.mxu0 %v729
        %822 = vmatpush.msra.mxu0 %v728
        %823 = vmatmul.f32.gmra.mxu0 %v805
        %v824 = vpop.f32.mrf.mxu0
        %v825 = vadd.f32 0.0, %v824
        %826 = vdwg.mxu0
        %v827 = vld [vmem:[%s5] sm:$0xff]
        %s828 = smul.f32 %s776, %s801
        %v829 = vstv %s828
        %v830 = vmul.f32 %v829, %v827
        %832 = vrot.lane.b32.xlu0 %v830, 127
        %v833 = vpop.permute.xlu0 %832
        %v835 = vsub.f32 %v827, %v833
        %v836 = vstv %s801
        %v837 = vmul.f32 %v825, %v836
        %839 = vset.pattern.permute.xlu0 0
        %840 = vperm.xlu0 %839, %v835
        %v841 = vpop.permute.xlu0 %840
        %v843 = vadd.f32 %v837, %v841
        %vm844 = vcmask 125952
        %845 = vst.msk [vmem:[%s273] sm:$0xf] %vm844, %v843
        %vm846 = vcmask 130052
        %847 = vst.msk [vmem:[%s280 - $0x4] sm:$0xf0] %vm846, %v843
        %s848 = sand.u32 %s164, 1
        %s849 = scalar_lea.sflag [#allocation4], %s848
        %s850 = sand.u32 %s164, 1
        %s851 = smul.addr %s850, 4
        %s852 = scalar_lea.vmem [#allocation3], %s851
        %s853 = sand.u32 %s190, 1
        %s854 = scalar_lea.sflag [#allocation6], %s853
        %s855 = sand.u32 %s190, 1
        %s856 = smul.addr %s855, 4
        %s857 = scalar_lea.vmem [#allocation5], %s856
        // Predicated region
        $region45: #{tpu_custom_call.1} parent=43 // pred_check
          %p858 = pneg %p174
        $region46: #{tpu_custom_call.1} parent=43 // pred_check_branch
          %860 = sbr.rel (%p858) target = $region48
        $region47: #{tpu_custom_call.1} parent=43 // pred_region
          %862 = vsyncadd %s849, 0
          %s863 = smul.addr %s25, 4
          %s864 = scalar_lea.hbm %s6, %s863
          %s866 = sshll.u32 %s852, 4
          %s867 = int_to_ptr.vmem [resolvable:$true] %s866
          %s868 = sshll.u32 %s864, 4
          %s869 = int_to_ptr.hbm [resolvable:$true] %s868
          %871 = dma.vmem_to_hbm [thread:$0]  %s867, 64, %s869, %s849
        $region48: #{tpu_custom_call.1} parent=43 // pred_fallthru
          _
        // Predicated region
        $region49: #{tpu_custom_call.1} parent=43 // pred_check
          %p872 = pneg %p200
        $region50: #{tpu_custom_call.1} parent=43 // pred_check_branch
          %874 = sbr.rel (%p872) target = $region52
        $region51: #{tpu_custom_call.1} parent=43 // pred_region
          %876 = vsyncadd %s854, 0
          %s877 = smul.addr %s25, 4
          %s878 = scalar_lea.hbm %s7, %s877
          %s880 = sshll.u32 %s857, 4
          %s881 = int_to_ptr.vmem [resolvable:$true] %s880
          %s882 = sshll.u32 %s878, 4
          %s883 = int_to_ptr.hbm [resolvable:$true] %s882
          %885 = dma.vmem_to_hbm [thread:$0]  %s881, 64, %s883, %s854
        $region52: #{tpu_custom_call.1} parent=43 // pred_fallthru
          _
      $region44: #{tpu_custom_call.1} parent=5 // pred_fallthru
        _
      %p886 = scmp.le.s32.totalorder 2, %s20
      // Predicated region
      $region53: #{tpu_custom_call.1} parent=5 // pred_check
        %p887 = pneg %p886
      $region54: #{tpu_custom_call.1} parent=5 // pred_check_branch
        %889 = sbr.rel (%p887) target = $region56
      $region55: #{tpu_custom_call.1} parent=5 // pred_region
        %s890 = ssub.s32 %s20, 2
        // Predicated region
        $region57: #{tpu_custom_call.1} parent=55 // pred_check
          %p891 = pneg %p180
        $region58: #{tpu_custom_call.1} parent=55 // pred_check_branch
          %893 = sbr.rel (%p891) target = $region60
        $region59: #{tpu_custom_call.1} parent=55 // pred_region
          %s894 = sand.u32 %s165, 1
          %s895 = scalar_lea.sflag [#allocation4], %s894
          %s896 = sand.u32 %s165, 1
          %s897 = smul.addr %s896, 4
          %s898 = scalar_lea.vmem [#allocation3], %s897
          %900 = dma.done %s895, 64
        $region60: #{tpu_custom_call.1} parent=55 // pred_fallthru
          _
        // Predicated region
        $region61: #{tpu_custom_call.1} parent=55 // pred_check
          %p901 = pneg %p206
        $region62: #{tpu_custom_call.1} parent=55 // pred_check_branch
          %903 = sbr.rel (%p901) target = $region64
        $region63: #{tpu_custom_call.1} parent=55 // pred_region
          %s904 = sand.u32 %s191, 1
          %s905 = scalar_lea.sflag [#allocation6], %s904
          %s906 = sand.u32 %s191, 1
          %s907 = smul.addr %s906, 4
          %s908 = scalar_lea.vmem [#allocation5], %s907
          %910 = dma.done %s905, 64
        $region64: #{tpu_custom_call.1} parent=55 // pred_fallthru
          _
      $region56: #{tpu_custom_call.1} parent=5 // pred_fallthru
        _
    $region6: #{tpu_custom_call.1} parent=1 // loop_footer
      %s24 = sadd.s32 1, %s20
    $region7: #{tpu_custom_call.1} parent=1 // loop_footer_branch
      %19 = sbr.rel target = $region3
    $region8: #{tpu_custom_call.1} parent=1 // loop_exit
      _
    %911 = vsyncpa [#allocation4], 1
    %s912 = scalar_lea.sflag [#allocation4], 1
    %913 = vsyncpa %s912, 1
    %914 = vsyncpa [#allocation6], 1
    %s915 = scalar_lea.sflag [#allocation6], 1
    %916 = vsyncpa %s915, 1

</llo_original>
